<compile_context>
chip_gen: v7x
topology: tpu7x:2x2x1
jax: 0.10.0
libtpu: 0.0.40
codegen_flags: <defaults>
</compile_context>

<pallas_src>
import jax
import jax.numpy as jnp
from jax.experimental import pallas as pl
from jax.experimental.pallas import tpu as pltpu


def _round_up(n, m):
    return ((n + m - 1) // m) * m


def _vmem_padded_bytes(arr):
    """Approximate VMEM footprint of a 2-D array (sublane/lane padding)."""
    r, c = arr.shape
    itemsize = jnp.dtype(arr.dtype).itemsize
    sublane = max(8, 32 // itemsize)           # 8 rows for f32, 16 for bf16
    return _round_up(r, sublane) * _round_up(c, 128) * itemsize


def _vmem_capacity_bytes():
    try:
        return int(pltpu.get_tpu_info().vmem_capacity_bytes)
    except Exception:
        return 64 * 1024 * 1024                # conservative: v7x per-TC VMEM


def sae_kernel(x_ref,
               w1_ref, b1_ref,
               w2_ref, b2_ref,
               w3_ref, b3_ref,
               w4_ref, b4_ref,
               o_ref):
    """Whole SAE forward pass for one batch tile, entirely in VMEM.

    x arrives in its HBM storage dtype (f32) and is cast to the weight dtype
    (bf16 or f32) just before the MXU matmuls; accumulation is f32, bias add
    and sigmoid stay f32 (v5e has no bf16 VPU/EUP), output is stored in
    o_ref.dtype.
    """
    mm_dtype = w1_ref.dtype
    x = x_ref[...].astype(mm_dtype)

    # fc1 + sigmoid
    h = jnp.dot(x, w1_ref[...], preferred_element_type=jnp.float32) + b1_ref[...]
    h = jax.nn.sigmoid(h)

    # fc2 + sigmoid (tiny 20->10 matmul)
    h = jnp.dot(h.astype(mm_dtype), w2_ref[...],
                preferred_element_type=jnp.float32) + b2_ref[...]
    h = jax.nn.sigmoid(h)

    # fc3 + sigmoid (tiny 10->20 matmul)
    h = jnp.dot(h.astype(mm_dtype), w3_ref[...],
                preferred_element_type=jnp.float32) + b3_ref[...]
    h = jax.nn.sigmoid(h)

    # fc4 (no activation)
    out = jnp.dot(h.astype(mm_dtype), w4_ref[...],
                  preferred_element_type=jnp.float32) + b4_ref[...]
    o_ref[...] = out.astype(o_ref.dtype)


def sae_forward(x, params, *, bm=512, use_bf16=True, out_dtype=None,
                lane_multiple=128, vmem_budget_bytes=None, trim_output=True):
    """SAE forward.

    x: (B, nb_movies) float32.
    params: dict of (in, out) weights 'w1'..'w4' and (1, out) biases 'b1'..'b4'.
    Returns (B, nb_movies) in `out_dtype` (bf16 by default on the bf16 path).
    """
    B, nb_movies = x.shape
    x_dtype = x.dtype
    mm_dtype = jnp.bfloat16 if use_bf16 else x_dtype
    if out_dtype is None:
        out_dtype = mm_dtype

    # ---- Lane-align the movie axis (128 is enough for unmasked stores). ----
    lane_multiple = max(int(lane_multiple), 128)
    M = _round_up(nb_movies, lane_multiple)
    pad_m = M - nb_movies

    w1 = jnp.pad(params["w1"], ((0, pad_m), (0, 0))).astype(mm_dtype)  # (M, 20)
    b1 = params["b1"].astype(jnp.float32)                              # (1, 20)
    w2 = params["w2"].astype(mm_dtype)                                 # (20, 10)
    b2 = params["b2"].astype(jnp.float32)                              # (1, 10)
    w3 = params["w3"].astype(mm_dtype)                                 # (10, 20)
    b3 = params["b3"].astype(jnp.float32)                              # (1, 20)
    w4 = jnp.pad(params["w4"], ((0, 0), (0, pad_m))).astype(mm_dtype)  # (20, M)
    b4 = jnp.pad(params["b4"], ((0, 0), (0, pad_m))).astype(jnp.float32)  # (1, M)
    weights = (w1, b1, w2, b2, w3, b3, w4, b4)

    x_sz = jnp.dtype(x_dtype).itemsize
    out_sz = jnp.dtype(out_dtype).itemsize
    mm_sz = jnp.dtype(mm_dtype).itemsize

    # ---- Generation-aware VMEM budget. ----
    vmem_cap = _vmem_capacity_bytes()
    if vmem_budget_bytes is None:
        # ~88 MiB on 128 MiB/TC parts (v5e/v6e), ~48 MiB on 64 MiB/TC (v7x).
        vmem_budget_bytes = (88 << 20) if vmem_cap >= (100 << 20) else (48 << 20)

    # Padded, double-buffered param footprint (w1 has its 20 lanes padded to
    # 128 in VMEM; biases pad to (8,128); every input spec is double-buffered).
    param_vmem = 2 * sum(_vmem_padded_bytes(a) for a in weights)

    def vmem_estimate(tile_m):
        tiles = 2 * tile_m * M * (x_sz + out_sz)        # double-buffered x/out
        interm = tile_m * M * (mm_sz + 4)               # bf16 x-cast + f32 fc4
        return tiles + interm + param_vmem

    # ---- Batch tile: as big as useful, never past the VMEM budget. ----
    min_bm = 16 if (use_bf16 or out_dtype == jnp.bfloat16) else 8
    bm = min(int(bm), _round_up(B, min_bm))
    while bm > min_bm and vmem_estimate(bm) > vmem_budget_bytes:
        bm //= 2
    bm = max(min_bm, (bm // min_bm) * min_bm)

    # v7x has 2 TensorCores; a "parallel" grid only shards across them if it
    # has >= 2 steps.  Split the batch when there is enough work for 2 tiles.
    if _round_up(B, bm) // bm < 2 and B >= 2 * 256:
        bm = max(256, min(bm, _round_up((B + 1) // 2, min_bm)))

    Bp = _round_up(B, bm)
    pad_b = Bp - B

    # Only materialize a padded copy of x when actually needed; no dtype cast
    # here (the cast happens inside the kernel, saving an HBM round trip).
    x_p = jnp.pad(x, ((0, pad_b), (0, pad_m))) if (pad_b or pad_m) else x

    est = vmem_estimate(bm)
    vmem_limit = int(max(16 << 20, min(est + (4 << 20),
                                       max(vmem_cap - (8 << 20), 16 << 20))))

    param_bytes = sum(int(a.size) * jnp.dtype(a.dtype).itemsize for a in weights)
    flops = 2 * Bp * (M * 20 + 20 * 10 + 10 * 20 + 20 * M)
    transcendentals = Bp * (20 + 10 + 20)                 # sigmoids
    bytes_accessed = Bp * M * (x_sz + out_sz) + param_bytes
    cost = pl.CostEstimate(flops=flops, transcendentals=transcendentals,
                           bytes_accessed=bytes_accessed)

    full = lambda arr: pl.BlockSpec(arr.shape, lambda i: (0, 0))
    grid = Bp // bm

    out_padded = pl.pallas_call(
        sae_kernel,
        out_shape=jax.ShapeDtypeStruct((Bp, M), out_dtype),
        grid_spec=pltpu.PrefetchScalarGridSpec(
            num_scalar_prefetch=0,
            grid=(grid,),
            in_specs=[
                pl.BlockSpec((bm, M), lambda i: (i, 0)),   # x tile
                full(w1), full(b1),
                full(w2), full(b2),
                full(w3), full(b3),
                full(w4), full(b4),
            ],
            out_specs=pl.BlockSpec((bm, M), lambda i: (i, 0)),
        ),
        compiler_params=pltpu.CompilerParams(
            dimension_semantics=("parallel",),
            vmem_limit_bytes=vmem_limit,
        ),
        cost_estimate=cost,
    )(x_p, w1, b1, w2, b2, w3, b3, w4, b4)

    if trim_output and (pad_b or pad_m):
        # Downstream consumers that tolerate the padded (Bp, M) shape should
        # pass trim_output=False to skip this extra HBM pass.
        return out_padded[:B, :nb_movies]
    return out_padded


def init_params(key, nb_movies):
    """PyTorch nn.Linear-style init (U[-1/sqrt(in), 1/sqrt(in)]).
    Weights stored transposed: (in_features, out_features)."""
    dims = [(nb_movies, 20), (20, 10), (10, 20), (20, nb_movies)]
    params = {}
    for idx, (fan_in, fan_out) in enumerate(dims, start=1):
        key, kw, kb = jax.random.split(key, 3)
        bound = 1.0 / jnp.sqrt(fan_in)
        params[f"w{idx}"] = jax.random.uniform(
            kw, (fan_in, fan_out), jnp.float32, -bound, bound)
        params[f"b{idx}"] = jax.random.uniform(
            kb, (1, fan_out), jnp.float32, -bound, bound)
    return params


def sae_reference(x, params):
    """Pure-JAX reference for correctness checking."""
    h = jax.nn.sigmoid(x @ params["w1"] + params["b1"])
    h = jax.nn.sigmoid(h @ params["w2"] + params["b2"])
    h = jax.nn.sigmoid(h @ params["w3"] + params["b3"])
    return h @ params["w4"] + params["b4"]


if __name__ == "__main__":
    # Small, deliberately ragged shapes: nb_movies not a multiple of 128 and a
    # batch that needs padding, to exercise the alignment / ragged paths.
    nb_movies = 300
    batch = 44

    key = jax.random.PRNGKey(0)
    key, kx = jax.random.split(key)
    params = init_params(key, nb_movies)
    # Ratings in [0, 5], like MovieLens user-movie matrix rows.
    x = jax.random.uniform(kx, (batch, nb_movies), jnp.float32, 0.0, 5.0)

    ref = sae_reference(x, params)

    # f32 path (f32 output): tight check against the pure-JAX reference.
    out_f32 = jax.block_until_ready(sae_forward(x, params, use_bf16=False))
    assert out_f32.shape == (batch, nb_movies)
    assert out_f32.dtype == jnp.float32
    assert jnp.allclose(out_f32, ref, atol=1e-5, rtol=1e-5)

    # bf16 MXU + bf16 output (the performance configuration): looser tolerance.
    out_bf16 = jax.block_until_ready(sae_forward(x, params, use_bf16=True))
    assert out_bf16.shape == (batch, nb_movies)
    assert out_bf16.dtype == jnp.bfloat16
    assert jnp.allclose(out_bf16.astype(jnp.float32), ref, atol=5e-2, rtol=5e-2)

    print("KERNEL_OK")
</pallas_src>

<mosaic_0001>
module attributes {stable_mosaic.version = 11 : i64} {
  func.func @sae_kernel(%arg0: i32, %arg1: memref<48x384xf32, #tpu.memory_space<vmem>>, %arg2: memref<384x20xf32, #tpu.memory_space<vmem>>, %arg3: memref<1x20xf32, #tpu.memory_space<vmem>>, %arg4: memref<20x10xf32, #tpu.memory_space<vmem>>, %arg5: memref<1x10xf32, #tpu.memory_space<vmem>>, %arg6: memref<10x20xf32, #tpu.memory_space<vmem>>, %arg7: memref<1x20xf32, #tpu.memory_space<vmem>>, %arg8: memref<20x384xf32, #tpu.memory_space<vmem>>, %arg9: memref<1x384xf32, #tpu.memory_space<vmem>>, %arg10: memref<48x384xf32, #tpu.memory_space<vmem>>) attributes {dimension_semantics = [#tpu.dimension_semantics<parallel>], iteration_bounds = array<i64: 1>, scalar_prefetch = 0 : i64, scratch_operands = 0 : i64, tpu.core_type = #tpu.core_type<tc>, window_params = [{transform_indices = @transform_0, window_bounds = array<i64: 48, 384>}, {pipeline_mode = #tpu.pipeline_mode<synchronous>, transform_indices = @transform_1, window_bounds = array<i64: 384, 20>}, {pipeline_mode = #tpu.pipeline_mode<synchronous>, transform_indices = @transform_2, window_bounds = array<i64: 1, 20>}, {pipeline_mode = #tpu.pipeline_mode<synchronous>, transform_indices = @transform_3, window_bounds = array<i64: 20, 10>}, {pipeline_mode = #tpu.pipeline_mode<synchronous>, transform_indices = @transform_4, window_bounds = array<i64: 1, 10>}, {pipeline_mode = #tpu.pipeline_mode<synchronous>, transform_indices = @transform_5, window_bounds = array<i64: 10, 20>}, {pipeline_mode = #tpu.pipeline_mode<synchronous>, transform_indices = @transform_6, window_bounds = array<i64: 1, 20>}, {pipeline_mode = #tpu.pipeline_mode<synchronous>, transform_indices = @transform_7, window_bounds = array<i64: 20, 384>}, {pipeline_mode = #tpu.pipeline_mode<synchronous>, transform_indices = @transform_8, window_bounds = array<i64: 1, 384>}, {transform_indices = @transform_9, window_bounds = array<i64: 48, 384>}]} {
    %c0 = arith.constant 0 : index
    %c0_0 = arith.constant 0 : index
    %0 = vector.load %arg1[%c0, %c0_0] : memref<48x384xf32, #tpu.memory_space<vmem>>, vector<48x384xf32>
    %c0_1 = arith.constant 0 : index
    %c0_2 = arith.constant 0 : index
    %1 = vector.load %arg2[%c0_1, %c0_2] : memref<384x20xf32, #tpu.memory_space<vmem>>, vector<384x20xf32>
    %cst = arith.constant dense<0.000000e+00> : vector<48x20xf32>
    %2 = tpu.matmul %0, %1, %cst {dimension_numbers = #tpu.dot_dimension_numbers<[1], [0], [0], [1], [0, 0, 1, 1], [], []>} : vector<48x384xf32>, vector<384x20xf32>, vector<48x20xf32> -> vector<48x20xf32>
    %c0_3 = arith.constant 0 : index
    %c0_4 = arith.constant 0 : index
    %3 = vector.load %arg3[%c0_3, %c0_4] : memref<1x20xf32, #tpu.memory_space<vmem>>, vector<1x20xf32>
    %4 = vector.broadcast %3 : vector<1x20xf32> to vector<48x20xf32>
    %5 = arith.addf %2, %4 : vector<48x20xf32>
    %6 = arith.negf %5 : vector<48x20xf32>
    %7 = math.exp %6 : vector<48x20xf32>
    %cst_5 = arith.constant 1.000000e+00 : f32
    %8 = vector.broadcast %cst_5 : f32 to vector<48x20xf32>
    %9 = arith.addf %8, %7 : vector<48x20xf32>
    %10 = arith.divf %8, %9 : vector<48x20xf32>
    %c0_6 = arith.constant 0 : index
    %c0_7 = arith.constant 0 : index
    %11 = vector.load %arg4[%c0_6, %c0_7] : memref<20x10xf32, #tpu.memory_space<vmem>>, vector<20x10xf32>
    %cst_8 = arith.constant dense<0.000000e+00> : vector<48x10xf32>
    %12 = tpu.matmul %10, %11, %cst_8 {dimension_numbers = #tpu.dot_dimension_numbers<[1], [0], [0], [1], [0, 0, 1, 1], [], []>} : vector<48x20xf32>, vector<20x10xf32>, vector<48x10xf32> -> vector<48x10xf32>
    %c0_9 = arith.constant 0 : index
    %c0_10 = arith.constant 0 : index
    %13 = vector.load %arg5[%c0_9, %c0_10] : memref<1x10xf32, #tpu.memory_space<vmem>>, vector<1x10xf32>
    %14 = vector.broadcast %13 : vector<1x10xf32> to vector<48x10xf32>
    %15 = arith.addf %12, %14 : vector<48x10xf32>
    %16 = arith.negf %15 : vector<48x10xf32>
    %17 = math.exp %16 : vector<48x10xf32>
    %cst_11 = arith.constant 1.000000e+00 : f32
    %18 = vector.broadcast %cst_11 : f32 to vector<48x10xf32>
    %19 = arith.addf %18, %17 : vector<48x10xf32>
    %20 = arith.divf %18, %19 : vector<48x10xf32>
    %c0_12 = arith.constant 0 : index
    %c0_13 = arith.constant 0 : index
    %21 = vector.load %arg6[%c0_12, %c0_13] : memref<10x20xf32, #tpu.memory_space<vmem>>, vector<10x20xf32>
    %cst_14 = arith.constant dense<0.000000e+00> : vector<48x20xf32>
    %22 = tpu.matmul %20, %21, %cst_14 {dimension_numbers = #tpu.dot_dimension_numbers<[1], [0], [0], [1], [0, 0, 1, 1], [], []>} : vector<48x10xf32>, vector<10x20xf32>, vector<48x20xf32> -> vector<48x20xf32>
    %c0_15 = arith.constant 0 : index
    %c0_16 = arith.constant 0 : index
    %23 = vector.load %arg7[%c0_15, %c0_16] : memref<1x20xf32, #tpu.memory_space<vmem>>, vector<1x20xf32>
    %24 = vector.broadcast %23 : vector<1x20xf32> to vector<48x20xf32>
    %25 = arith.addf %22, %24 : vector<48x20xf32>
    %26 = arith.negf %25 : vector<48x20xf32>
    %27 = math.exp %26 : vector<48x20xf32>
    %cst_17 = arith.constant 1.000000e+00 : f32
    %28 = vector.broadcast %cst_17 : f32 to vector<48x20xf32>
    %29 = arith.addf %28, %27 : vector<48x20xf32>
    %30 = arith.divf %28, %29 : vector<48x20xf32>
    %c0_18 = arith.constant 0 : index
    %c0_19 = arith.constant 0 : index
    %31 = vector.load %arg8[%c0_18, %c0_19] : memref<20x384xf32, #tpu.memory_space<vmem>>, vector<20x384xf32>
    %cst_20 = arith.constant dense<0.000000e+00> : vector<48x384xf32>
    %32 = tpu.matmul %30, %31, %cst_20 {dimension_numbers = #tpu.dot_dimension_numbers<[1], [0], [0], [1], [0, 0, 1, 1], [], []>} : vector<48x20xf32>, vector<20x384xf32>, vector<48x384xf32> -> vector<48x384xf32>
    %c0_21 = arith.constant 0 : index
    %c0_22 = arith.constant 0 : index
    %33 = vector.load %arg9[%c0_21, %c0_22] : memref<1x384xf32, #tpu.memory_space<vmem>>, vector<1x384xf32>
    %34 = vector.broadcast %33 : vector<1x384xf32> to vector<48x384xf32>
    %35 = arith.addf %32, %34 : vector<48x384xf32>
    %c0_23 = arith.constant 0 : index
    %c0_24 = arith.constant 0 : index
    %36 = vector.load %arg10[%c0_23, %c0_24] : memref<48x384xf32, #tpu.memory_space<vmem>>, vector<48x384xf32>
    tpu.vector_store %arg10[%c0_23, %c0_24], %35 {strides = array<i32>} : memref<48x384xf32, #tpu.memory_space<vmem>>, vector<48x384xf32>,
    return
  }
  func.func @transform_0(%arg0: i32) -> (i32, i32) {
    %c0_i32 = arith.constant 0 : i32
    %c0_i32_0 = arith.constant 0 : i32
    return %arg0, %c0_i32 : i32, i32
  }
  func.func @transform_1(%arg0: i32) -> (i32, i32) {
    %c0_i32 = arith.constant 0 : i32
    %c0_i32_0 = arith.constant 0 : i32
    %c0_i32_1 = arith.constant 0 : i32
    return %c0_i32, %c0_i32_0 : i32, i32
  }
  func.func @transform_2(%arg0: i32) -> (i32, i32) {
    %c0_i32 = arith.constant 0 : i32
    %c0_i32_0 = arith.constant 0 : i32
    %c0_i32_1 = arith.constant 0 : i32
    return %c0_i32, %c0_i32_0 : i32, i32
  }
  func.func @transform_3(%arg0: i32) -> (i32, i32) {
    %c0_i32 = arith.constant 0 : i32
    %c0_i32_0 = arith.constant 0 : i32
    %c0_i32_1 = arith.constant 0 : i32
    return %c0_i32, %c0_i32_0 : i32, i32
  }
  func.func @transform_4(%arg0: i32) -> (i32, i32) {
    %c0_i32 = arith.constant 0 : i32
    %c0_i32_0 = arith.constant 0 : i32
    %c0_i32_1 = arith.constant 0 : i32
    return %c0_i32, %c0_i32_0 : i32, i32
  }
  func.func @transform_5(%arg0: i32) -> (i32, i32) {
    %c0_i32 = arith.constant 0 : i32
    %c0_i32_0 = arith.constant 0 : i32
    %c0_i32_1 = arith.constant 0 : i32
    return %c0_i32, %c0_i32_0 : i32, i32
  }
  func.func @transform_6(%arg0: i32) -> (i32, i32) {
    %c0_i32 = arith.constant 0 : i32
    %c0_i32_0 = arith.constant 0 : i32
    %c0_i32_1 = arith.constant 0 : i32
    return %c0_i32, %c0_i32_0 : i32, i32
  }
  func.func @transform_7(%arg0: i32) -> (i32, i32) {
    %c0_i32 = arith.constant 0 : i32
    %c0_i32_0 = arith.constant 0 : i32
    %c0_i32_1 = arith.constant 0 : i32
    return %c0_i32, %c0_i32_0 : i32, i32
  }
  func.func @transform_8(%arg0: i32) -> (i32, i32) {
    %c0_i32 = arith.constant 0 : i32
    %c0_i32_0 = arith.constant 0 : i32
    %c0_i32_1 = arith.constant 0 : i32
    return %c0_i32, %c0_i32_0 : i32, i32
  }
  func.func @transform_9(%arg0: i32) -> (i32, i32) {
    %c0_i32 = arith.constant 0 : i32
    %c0_i32_0 = arith.constant 0 : i32
    return %arg0, %c0_i32 : i32, i32
  }
}

</mosaic_0001>

<llo_original>
// kernel: tpu_custom_call.1
$region0: #{tpu_custom_call.1}
  #allocation0 [shape = 'u32[]', space=smem, size = 0x4, offset = 0x4, fixed_abs, tag = 'smem constant byte address 0x4 - core index']
  #allocation1 [shape = 'u32[144,128]{1,0:T(1,128)}', space=vmem, size = 0x12000, scoped, tag = 'internal scratch']
  %s0 = inlined_call_operand.vmem [shape: f32[48,384], index: 0, kind: input, shape index: {}]
  %s1 = inlined_call_operand.vmem [shape: f32[384,20], index: 1, kind: input, shape index: {}]
  %s2 = inlined_call_operand.vmem [shape: f32[1,20], index: 2, kind: input, shape index: {}]
  %s3 = inlined_call_operand.vmem [shape: f32[20,10], index: 3, kind: input, shape index: {}]
  %s4 = inlined_call_operand.vmem [shape: f32[1,10], index: 4, kind: input, shape index: {}]
  %s5 = inlined_call_operand.vmem [shape: f32[10,20], index: 5, kind: input, shape index: {}]
  %s6 = inlined_call_operand.vmem [shape: f32[1,20], index: 6, kind: input, shape index: {}]
  %s7 = inlined_call_operand.vmem [shape: f32[20,384], index: 7, kind: input, shape index: {}]
  %s8 = inlined_call_operand.vmem [shape: f32[1,384], index: 8, kind: input, shape index: {}]
  %s9 = inlined_call_operand.hbm [shape: f32[48,384], index: 9, kind: output, shape index: {}]
  %s10 = sld [smem:[#allocation0]]
  $region46: #{tpu_custom_call.1} parent=0
    _
  %s12 = ssub.s32 1, %s10
  %s13 = scalar_select 0, %s12, %s10
  $region1: #{tpu_custom_call.1} parent=0
    #allocation2 [shape = 'u8[73728]{0}', space=vmem, size = 0x12000, scoped, tag = 'output window, operand 0, single buffered']
    #allocation3 [shape = 's32[1]{0}', space=sflag, size = 0x4, scoped, tag = 'scoped memory for tpu_custom_call.1']
    %14 = vsyncpa [#allocation3], 0
    // Predicated region
    $region2: #{tpu_custom_call.1} parent=1 // pred_check
      _
    $region3: #{tpu_custom_call.1} parent=1 // pred_check_branch
      %16 = sbr.rel (0) target = $region5
    $region4: #{tpu_custom_call.1} parent=1 // pred_region
      _
    $region5: #{tpu_custom_call.1} parent=1 // pred_fallthru
      _
    // Predicated region
    $region6: #{tpu_custom_call.1} parent=1 // pred_check
      _
    $region7: #{tpu_custom_call.1} parent=1 // pred_check_branch
      %18 = sbr.rel (0) target = $region9
    $region8: #{tpu_custom_call.1} parent=1 // pred_region
      _
    $region9: #{tpu_custom_call.1} parent=1 // pred_fallthru
      _
    // Predicated region
    $region10: #{tpu_custom_call.1} parent=1 // pred_check
      _
    $region11: #{tpu_custom_call.1} parent=1 // pred_check_branch
      %20 = sbr.rel (0) target = $region13
    $region12: #{tpu_custom_call.1} parent=1 // pred_region
      _
    $region13: #{tpu_custom_call.1} parent=1 // pred_fallthru
      _
    // Predicated region
    $region14: #{tpu_custom_call.1} parent=1 // pred_check
      _
    $region15: #{tpu_custom_call.1} parent=1 // pred_check_branch
      %22 = sbr.rel (0) target = $region17
    $region16: #{tpu_custom_call.1} parent=1 // pred_region
      _
    $region17: #{tpu_custom_call.1} parent=1 // pred_fallthru
      _
    // Predicated region
    $region18: #{tpu_custom_call.1} parent=1 // pred_check
      _
    $region19: #{tpu_custom_call.1} parent=1 // pred_check_branch
      %24 = sbr.rel (0) target = $region21
    $region20: #{tpu_custom_call.1} parent=1 // pred_region
      _
    $region21: #{tpu_custom_call.1} parent=1 // pred_fallthru
      _
    // Predicated region
    $region22: #{tpu_custom_call.1} parent=1 // pred_check
      _
    $region23: #{tpu_custom_call.1} parent=1 // pred_check_branch
      %26 = sbr.rel (0) target = $region25
    $region24: #{tpu_custom_call.1} parent=1 // pred_region
      _
    $region25: #{tpu_custom_call.1} parent=1 // pred_fallthru
      _
    // Predicated region
    $region26: #{tpu_custom_call.1} parent=1 // pred_check
      _
    $region27: #{tpu_custom_call.1} parent=1 // pred_check_branch
      %28 = sbr.rel (0) target = $region29
    $region28: #{tpu_custom_call.1} parent=1 // pred_region
      _
    $region29: #{tpu_custom_call.1} parent=1 // pred_fallthru
      _
    // Predicated region
    $region30: #{tpu_custom_call.1} parent=1 // pred_check
      _
    $region31: #{tpu_custom_call.1} parent=1 // pred_check_branch
      %30 = sbr.rel (0) target = $region33
    $region32: #{tpu_custom_call.1} parent=1 // pred_region
      _
    $region33: #{tpu_custom_call.1} parent=1 // pred_fallthru
      _
    // Predicated region
    $region34: #{tpu_custom_call.1} parent=1 // pred_check
      _
    $region35: #{tpu_custom_call.1} parent=1 // pred_check_branch
      %32 = sbr.rel (0) target = $region37
    $region36: #{tpu_custom_call.1} parent=1 // pred_region
      _
    $region37: #{tpu_custom_call.1} parent=1 // pred_fallthru
      _
    %v33 = vld [vmem:[%s0] sm:$0xff]
    %v34 = vld [vmem:[%s0 + $0x8] sm:$0xff]
    %v35 = vld [vmem:[%s0 + $0x10] sm:$0xff]
    %v36 = vld [vmem:[%s0 + $0x18] sm:$0xff]
    %v37 = vld [vmem:[%s0 + $0x20] sm:$0xff]
    %v38 = vld [vmem:[%s0 + $0x28] sm:$0xff]
    %v39 = vld [vmem:[%s0 + $0x30] sm:$0xff]
    %v40 = vld [vmem:[%s0 + $0x38] sm:$0xff]
    %v41 = vld [vmem:[%s0 + $0x40] sm:$0xff]
    %v42 = vld [vmem:[%s0 + $0x48] sm:$0xff]
    %v43 = vld [vmem:[%s0 + $0x50] sm:$0xff]
    %v44 = vld [vmem:[%s0 + $0x58] sm:$0xff]
    %v45 = vld [vmem:[%s0 + $0x60] sm:$0xff]
    %v46 = vld [vmem:[%s0 + $0x68] sm:$0xff]
    %v47 = vld [vmem:[%s0 + $0x70] sm:$0xff]
    %v48 = vld [vmem:[%s0 + $0x78] sm:$0xff]
    %v49 = vld [vmem:[%s0 + $0x80] sm:$0xff]
    %v50 = vld [vmem:[%s0 + $0x88] sm:$0xff]
    %v51 = vld [vmem:[%s1] sm:$0xff]
    %v52 = vld [vmem:[%s1 + $0x8] sm:$0xff]
    %v53 = vld [vmem:[%s1 + $0x10] sm:$0xff]
    %v54 = vld [vmem:[%s1 + $0x18] sm:$0xff]
    %v55 = vld [vmem:[%s1 + $0x20] sm:$0xff]
    %v56 = vld [vmem:[%s1 + $0x28] sm:$0xff]
    %v57 = vld [vmem:[%s1 + $0x30] sm:$0xff]
    %v58 = vld [vmem:[%s1 + $0x38] sm:$0xff]
    %v59 = vld [vmem:[%s1 + $0x40] sm:$0xff]
    %v60 = vld [vmem:[%s1 + $0x48] sm:$0xff]
    %v61 = vld [vmem:[%s1 + $0x50] sm:$0xff]
    %v62 = vld [vmem:[%s1 + $0x58] sm:$0xff]
    %v63 = vld [vmem:[%s1 + $0x60] sm:$0xff]
    %v64 = vld [vmem:[%s1 + $0x68] sm:$0xff]
    %v65 = vld [vmem:[%s1 + $0x70] sm:$0xff]
    %v66 = vld [vmem:[%s1 + $0x78] sm:$0xff]
    %v67 = vld [vmem:[%s1 + $0x80] sm:$0xff]
    %v68 = vld [vmem:[%s1 + $0x88] sm:$0xff]
    %v69 = vld [vmem:[%s1 + $0x90] sm:$0xff]
    %v70 = vld [vmem:[%s1 + $0x98] sm:$0xff]
    %v71 = vld [vmem:[%s1 + $0xa0] sm:$0xff]
    %v72 = vld [vmem:[%s1 + $0xa8] sm:$0xff]
    %v73 = vld [vmem:[%s1 + $0xb0] sm:$0xff]
    %v74 = vld [vmem:[%s1 + $0xb8] sm:$0xff]
    %v75 = vld [vmem:[%s1 + $0xc0] sm:$0xff]
    %v76 = vld [vmem:[%s1 + $0xc8] sm:$0xff]
    %v77 = vld [vmem:[%s1 + $0xd0] sm:$0xff]
    %v78 = vld [vmem:[%s1 + $0xd8] sm:$0xff]
    %v79 = vld [vmem:[%s1 + $0xe0] sm:$0xff]
    %v80 = vld [vmem:[%s1 + $0xe8] sm:$0xff]
    %v81 = vld [vmem:[%s1 + $0xf0] sm:$0xff]
    %v82 = vld [vmem:[%s1 + $0xf8] sm:$0xff]
    %v83 = vld [vmem:[%s1 + $0x100] sm:$0xff]
    %v84 = vld [vmem:[%s1 + $0x108] sm:$0xff]
    %v85 = vld [vmem:[%s1 + $0x110] sm:$0xff]
    %v86 = vld [vmem:[%s1 + $0x118] sm:$0xff]
    %v87 = vld [vmem:[%s1 + $0x120] sm:$0xff]
    %v88 = vld [vmem:[%s1 + $0x128] sm:$0xff]
    %v89 = vld [vmem:[%s1 + $0x130] sm:$0xff]
    %v90 = vld [vmem:[%s1 + $0x138] sm:$0xff]
    %v91 = vld [vmem:[%s1 + $0x140] sm:$0xff]
    %v92 = vld [vmem:[%s1 + $0x148] sm:$0xff]
    %v93 = vld [vmem:[%s1 + $0x150] sm:$0xff]
    %v94 = vld [vmem:[%s1 + $0x158] sm:$0xff]
    %v95 = vld [vmem:[%s1 + $0x160] sm:$0xff]
    %v96 = vld [vmem:[%s1 + $0x168] sm:$0xff]
    %v97 = vld [vmem:[%s1 + $0x170] sm:$0xff]
    %v98 = vld [vmem:[%s1 + $0x178] sm:$0xff]
    %v99 = vld [vmem:[%s2] sm:$0x1]
    %v101 = vlaneseq
    %v102 = vshrl.u32 %v101, 7
    %v103 = vsub.s32 0, %v102
    %v104 = vrot.slane %v99, %v103
    %106 = vmatprep.subr.mxu0 0.0
    %107 = vmatpush1.msra.mxu0 %v51
    %108 = vmatprep.subr.mxu0 0.0
    %109 = vmatpush1.msra.mxu0 %v52
    %110 = vmatprep.subr.mxu0 0.0
    %111 = vmatpush1.msra.mxu0 %v53
    %112 = vmatprep.subr.mxu0 0.0
    %113 = vmatpush1.msra.mxu0 %v54
    %114 = vmatprep.subr.mxu0 0.0
    %115 = vmatpush1.msra.mxu0 %v55
    %116 = vmatprep.subr.mxu0 0.0
    %117 = vmatpush1.msra.mxu0 %v56
    %118 = vmatprep.subr.mxu0 0.0
    %119 = vmatpush1.msra.mxu0 %v57
    %120 = vmatprep.subr.mxu0 0.0
    %121 = vmatpush1.msra.mxu0 %v58
    %122 = vmatprep.subr.mxu0 0.0
    %123 = vmatpush1.msra.mxu0 %v59
    %124 = vmatprep.subr.mxu0 0.0
    %125 = vmatpush1.msra.mxu0 %v60
    %126 = vmatprep.subr.mxu0 0.0
    %127 = vmatpush1.msra.mxu0 %v61
    %128 = vmatprep.subr.mxu0 0.0
    %129 = vmatpush1.msra.mxu0 %v62
    %130 = vmatprep.subr.mxu0 0.0
    %131 = vmatpush1.msra.mxu0 %v63
    %132 = vmatprep.subr.mxu0 0.0
    %133 = vmatpush1.msra.mxu0 %v64
    %134 = vmatprep.subr.mxu0 0.0
    %135 = vmatpush1.msra.mxu0 %v65
    %136 = vmatprep.subr.mxu0 0.0
    %137 = vmatpush1.msra.mxu0 %v66
    %138 = vmatprep.subr.mxu0 0.0
    %139 = vmatpush1.msra.mxu0 %v67
    %140 = vmatprep.subr.mxu0 0.0
    %141 = vmatpush1.msra.mxu0 %v68
    %142 = vmatprep.subr.mxu0 0.0
    %143 = vmatpush1.msra.mxu0 %v69
    %144 = vmatprep.subr.mxu0 0.0
    %145 = vmatpush1.msra.mxu0 %v70
    %146 = vmatprep.subr.mxu0 0.0
    %147 = vmatpush1.msra.mxu0 %v71
    %148 = vmatprep.subr.mxu0 0.0
    %149 = vmatpush1.msra.mxu0 %v72
    %150 = vmatprep.subr.mxu0 0.0
    %151 = vmatpush1.msra.mxu0 %v73
    %152 = vmatprep.subr.mxu0 0.0
    %153 = vmatpush1.msra.mxu0 %v74
    %154 = vmatprep.subr.mxu0 0.0
    %155 = vmatpush1.msra.mxu0 %v75
    %156 = vmatprep.subr.mxu0 0.0
    %157 = vmatpush1.msra.mxu0 %v76
    %158 = vmatprep.subr.mxu0 0.0
    %159 = vmatpush1.msra.mxu0 %v77
    %160 = vmatprep.subr.mxu0 0.0
    %161 = vmatpush1.msra.mxu0 %v78
    %162 = vmatprep.subr.mxu0 0.0
    %163 = vmatpush1.msra.mxu0 %v79
    %164 = vmatprep.subr.mxu0 0.0
    %165 = vmatpush1.msra.mxu0 %v80
    %166 = vmatprep.subr.mxu0 0.0
    %167 = vmatpush1.msra.mxu0 %v81
    %168 = vmatprep.subr.mxu0 0.0
    %169 = vmatpush1.msra.mxu0 %v82
    %170 = vmatprep.mubr.f32.mxu0 %v34
    %171 = vmatmul.mubr.f32.gmra.mrb[0].mxu0 %v33
    %v172 = vpop.f32.mrb[0].mxu0
    %v173 = vadd.f32 %v104, %v172
    %v174 = vpop.f32.mrb[0].mxu0
    %175 = vmatprep.mubr.f32.mxu0 %v37
    %176 = vmatmul.mubr.f32.gmra.mrb[0].mxu0 %v36
    %v177 = vpop.f32.mrb[0].mxu0
    %v178 = vadd.f32 %v104, %v177
    %v179 = vpop.f32.mrb[0].mxu0
    %180 = vmatprep.mubr.f32.mxu0 %v40
    %181 = vmatmul.mubr.f32.gmra.mrb[0].mxu0 %v39
    %v182 = vpop.f32.mrb[0].mxu0
    %v183 = vadd.f32 %v104, %v182
    %v184 = vpop.f32.mrb[0].mxu0
    %185 = vmatprep.mubr.f32.mxu0 %v43
    %186 = vmatmul.mubr.f32.gmra.mrb[0].mxu0 %v42
    %v187 = vpop.f32.mrb[0].mxu0
    %v188 = vadd.f32 %v104, %v187
    %v189 = vpop.f32.mrb[0].mxu0
    %190 = vmatprep.mubr.f32.mxu0 %v46
    %191 = vmatmul.mubr.f32.gmra.mrb[0].mxu0 %v45
    %v192 = vpop.f32.mrb[0].mxu0
    %v193 = vadd.f32 %v104, %v192
    %v194 = vpop.f32.mrb[0].mxu0
    %195 = vmatprep.mubr.f32.mxu0 %v49
    %196 = vmatmul.mubr.f32.gmra.mrb[0].mxu0 %v48
    %v197 = vpop.f32.mrb[0].mxu0
    %v198 = vadd.f32 %v104, %v197
    %v199 = vpop.f32.mrb[0].mxu0
    %200 = vdwg.mxu0
    %201 = vmatprep.subr.mxu0 0.0
    %202 = vmatpush1.msra.mxu0 %v83
    %203 = vmatprep.subr.mxu0 0.0
    %204 = vmatpush1.msra.mxu0 %v84
    %205 = vmatprep.subr.mxu0 0.0
    %206 = vmatpush1.msra.mxu0 %v85
    %207 = vmatprep.subr.mxu0 0.0
    %208 = vmatpush1.msra.mxu0 %v86
    %209 = vmatprep.subr.mxu0 0.0
    %210 = vmatpush1.msra.mxu0 %v87
    %211 = vmatprep.subr.mxu0 0.0
    %212 = vmatpush1.msra.mxu0 %v88
    %213 = vmatprep.subr.mxu0 0.0
    %214 = vmatpush1.msra.mxu0 %v89
    %215 = vmatprep.subr.mxu0 0.0
    %216 = vmatpush1.msra.mxu0 %v90
    %217 = vmatprep.subr.mxu0 0.0
    %218 = vmatpush1.msra.mxu0 %v91
    %219 = vmatprep.subr.mxu0 0.0
    %220 = vmatpush1.msra.mxu0 %v92
    %221 = vmatprep.subr.mxu0 0.0
    %222 = vmatpush1.msra.mxu0 %v93
    %223 = vmatprep.subr.mxu0 0.0
    %224 = vmatpush1.msra.mxu0 %v94
    %225 = vmatprep.subr.mxu0 0.0
    %226 = vmatpush1.msra.mxu0 %v95
    %227 = vmatprep.subr.mxu0 0.0
    %228 = vmatpush1.msra.mxu0 %v96
    %229 = vmatprep.subr.mxu0 0.0
    %230 = vmatpush1.msra.mxu0 %v97
    %231 = vmatprep.subr.mxu0 0.0
    %232 = vmatpush1.msra.mxu0 %v98
    %233 = vmatprep.subr.mxu0 0.0
    %234 = vmatpush1.msra.mxu0 0.0
    %235 = vmatprep.subr.mxu0 0.0
    %236 = vmatpush1.msra.mxu0 0.0
    %237 = vmatprep.subr.mxu0 0.0
    %238 = vmatpush1.msra.mxu0 0.0
    %239 = vmatprep.subr.mxu0 0.0
    %240 = vmatpush1.msra.mxu0 0.0
    %241 = vmatprep.subr.mxu0 0.0
    %242 = vmatpush1.msra.mxu0 0.0
    %243 = vmatprep.subr.mxu0 0.0
    %244 = vmatpush1.msra.mxu0 0.0
    %245 = vmatprep.subr.mxu0 0.0
    %246 = vmatpush1.msra.mxu0 0.0
    %247 = vmatprep.subr.mxu0 0.0
    %248 = vmatpush1.msra.mxu0 0.0
    %249 = vmatprep.subr.mxu0 0.0
    %250 = vmatpush1.msra.mxu0 0.0
    %251 = vmatprep.subr.mxu0 0.0
    %252 = vmatpush1.msra.mxu0 0.0
    %253 = vmatprep.subr.mxu0 0.0
    %254 = vmatpush1.msra.mxu0 0.0
    %255 = vmatprep.subr.mxu0 0.0
    %256 = vmatpush1.msra.mxu0 0.0
    %257 = vmatprep.subr.mxu0 0.0
    %258 = vmatpush1.msra.mxu0 0.0
    %259 = vmatprep.subr.mxu0 0.0
    %260 = vmatpush1.msra.mxu0 0.0
    %261 = vmatprep.subr.mxu0 0.0
    %262 = vmatpush1.msra.mxu0 0.0
    %263 = vmatprep.subr.mxu0 0.0
    %264 = vmatpush1.msra.mxu0 0.0
    %265 = vmatprep.mubr.f32.mxu0 0.0
    %266 = vmatmul.mubr.f32.gmra.mrb[0].mxu0 %v35
    %v267 = vpop.f32.mrb[0].mxu0
    %v268 = vadd.f32 %v173, %v267
    %v269 = vpop.f32.mrb[0].mxu0
    %270 = vmatprep.mubr.f32.mxu0 0.0
    %271 = vmatmul.mubr.f32.gmra.mrb[0].mxu0 %v38
    %v272 = vpop.f32.mrb[0].mxu0
    %v273 = vadd.f32 %v178, %v272
    %v274 = vpop.f32.mrb[0].mxu0
    %275 = vmatprep.mubr.f32.mxu0 0.0
    %276 = vmatmul.mubr.f32.gmra.mrb[0].mxu0 %v41
    %v277 = vpop.f32.mrb[0].mxu0
    %v278 = vadd.f32 %v183, %v277
    %v279 = vpop.f32.mrb[0].mxu0
    %280 = vmatprep.mubr.f32.mxu0 0.0
    %281 = vmatmul.mubr.f32.gmra.mrb[0].mxu0 %v44
    %v282 = vpop.f32.mrb[0].mxu0
    %v283 = vadd.f32 %v188, %v282
    %v284 = vpop.f32.mrb[0].mxu0
    %285 = vmatprep.mubr.f32.mxu0 0.0
    %286 = vmatmul.mubr.f32.gmra.mrb[0].mxu0 %v47
    %v287 = vpop.f32.mrb[0].mxu0
    %v288 = vadd.f32 %v193, %v287
    %v289 = vpop.f32.mrb[0].mxu0
    %290 = vmatprep.mubr.f32.mxu0 0.0
    %291 = vmatmul.mubr.f32.gmra.mrb[0].mxu0 %v50
    %v292 = vpop.f32.mrb[0].mxu0
    %v293 = vadd.f32 %v198, %v292
    %v294 = vpop.f32.mrb[0].mxu0
    %295 = vdwg.mxu0
    %v296 = vxor.u32 %v268, 2147483648
    %v297 = vxor.u32 %v273, 2147483648
    %v298 = vxor.u32 %v278, 2147483648
    %v299 = vxor.u32 %v283, 2147483648
    %v300 = vxor.u32 %v288, 2147483648
    %v301 = vxor.u32 %v293, 2147483648
    %v302 = vmul.f32 %v296, 1.442695
    %v303 = vpow.pop %v302
    %v304 = vmul.f32 %v297, 1.442695
    %v305 = vpow.pop %v304
    %v306 = vmul.f32 %v298, 1.442695
    %v307 = vpow.pop %v306
    %v308 = vmul.f32 %v299, 1.442695
    %v309 = vpow.pop %v308
    %v310 = vmul.f32 %v300, 1.442695
    %v311 = vpow.pop %v310
    %v312 = vmul.f32 %v301, 1.442695
    %v313 = vpow.pop %v312
    %v314 = vadd.f32 %v303, 1.0
    %v315 = vadd.f32 %v305, 1.0
    %v316 = vadd.f32 %v307, 1.0
    %v317 = vadd.f32 %v309, 1.0
    %v318 = vadd.f32 %v311, 1.0
    %v319 = vadd.f32 %v313, 1.0
    %v320 = vrcp.pop %v314
    %v321 = vmul.f32 1.0, %v320
    %v322 = vrcp.pop %v315
    %v323 = vmul.f32 1.0, %v322
    %v324 = vrcp.pop %v316
    %v325 = vmul.f32 1.0, %v324
    %v326 = vrcp.pop %v317
    %v327 = vmul.f32 1.0, %v326
    %v328 = vrcp.pop %v318
    %v329 = vmul.f32 1.0, %v328
    %v330 = vrcp.pop %v319
    %v331 = vmul.f32 1.0, %v330
    %v332 = vld [vmem:[%s3] sm:$0xff]
    %v333 = vld [vmem:[%s3 + $0x8] sm:$0xff]
    %v334 = vld [vmem:[%s3 + $0x10] sm:$0xf]
    %v335 = vld [vmem:[%s4] sm:$0x1]
    %v337 = vlaneseq
    %v338 = vshrl.u32 %v337, 7
    %v339 = vsub.s32 0, %v338
    %v340 = vrot.slane %v335, %v339
    %vm342 = vcmask 162816
    %v344 = vsel %vm342, %v321, 0
    %v347 = vsel %vm342, %v323, 0
    %v350 = vsel %vm342, %v325, 0
    %v353 = vsel %vm342, %v327, 0
    %v356 = vsel %vm342, %v329, 0
    %v359 = vsel %vm342, %v331, 0
    %vm361 = vcmask 1043456
    %v363 = vsel %vm361, %v334, 0
    %365 = vmatprep.subr.mxu0 0.0
    %366 = vmatpush1.msra.mxu0 %v332
    %367 = vmatprep.subr.mxu0 0.0
    %368 = vmatpush1.msra.mxu0 %v333
    %369 = vmatprep.subr.mxu0 0.0
    %370 = vmatpush1.msra.mxu0 %v363
    %371 = vmatprep.subr.mxu0 0.0
    %372 = vmatpush1.msra.mxu0 0.0
    %373 = vmatprep.subr.mxu0 0.0
    %374 = vmatpush1.msra.mxu0 0.0
    %375 = vmatprep.subr.mxu0 0.0
    %376 = vmatpush1.msra.mxu0 0.0
    %377 = vmatprep.subr.mxu0 0.0
    %378 = vmatpush1.msra.mxu0 0.0
    %379 = vmatprep.subr.mxu0 0.0
    %380 = vmatpush1.msra.mxu0 0.0
    %381 = vmatprep.subr.mxu0 0.0
    %382 = vmatpush1.msra.mxu0 0.0
    %383 = vmatprep.subr.mxu0 0.0
    %384 = vmatpush1.msra.mxu0 0.0
    %385 = vmatprep.subr.mxu0 0.0
    %386 = vmatpush1.msra.mxu0 0.0
    %387 = vmatprep.subr.mxu0 0.0
    %388 = vmatpush1.msra.mxu0 0.0
    %389 = vmatprep.subr.mxu0 0.0
    %390 = vmatpush1.msra.mxu0 0.0
    %391 = vmatprep.subr.mxu0 0.0
    %392 = vmatpush1.msra.mxu0 0.0
    %393 = vmatprep.subr.mxu0 0.0
    %394 = vmatpush1.msra.mxu0 0.0
    %395 = vmatprep.subr.mxu0 0.0
    %396 = vmatpush1.msra.mxu0 0.0
    %397 = vmatprep.subr.mxu0 0.0
    %398 = vmatpush1.msra.mxu0 0.0
    %399 = vmatprep.subr.mxu0 0.0
    %400 = vmatpush1.msra.mxu0 0.0
    %401 = vmatprep.subr.mxu0 0.0
    %402 = vmatpush1.msra.mxu0 0.0
    %403 = vmatprep.subr.mxu0 0.0
    %404 = vmatpush1.msra.mxu0 0.0
    %405 = vmatprep.subr.mxu0 0.0
    %406 = vmatpush1.msra.mxu0 0.0
    %407 = vmatprep.subr.mxu0 0.0
    %408 = vmatpush1.msra.mxu0 0.0
    %409 = vmatprep.subr.mxu0 0.0
    %410 = vmatpush1.msra.mxu0 0.0
    %411 = vmatprep.subr.mxu0 0.0
    %412 = vmatpush1.msra.mxu0 0.0
    %413 = vmatprep.subr.mxu0 0.0
    %414 = vmatpush1.msra.mxu0 0.0
    %415 = vmatprep.subr.mxu0 0.0
    %416 = vmatpush1.msra.mxu0 0.0
    %417 = vmatprep.subr.mxu0 0.0
    %418 = vmatpush1.msra.mxu0 0.0
    %419 = vmatprep.subr.mxu0 0.0
    %420 = vmatpush1.msra.mxu0 0.0
    %421 = vmatprep.subr.mxu0 0.0
    %422 = vmatpush1.msra.mxu0 0.0
    %423 = vmatprep.subr.mxu0 0.0
    %424 = vmatpush1.msra.mxu0 0.0
    %425 = vmatprep.subr.mxu0 0.0
    %426 = vmatpush1.msra.mxu0 0.0
    %427 = vmatprep.subr.mxu0 0.0
    %428 = vmatpush1.msra.mxu0 0.0
    %429 = vmatprep.mubr.f32.mxu0 0.0
    %430 = vmatmul.mubr.f32.gmra.mrb[0].mxu0 %v344
    %v431 = vpop.f32.mrb[0].mxu0
    %v432 = vadd.f32 %v340, %v431
    %v433 = vpop.f32.mrb[0].mxu0
    %434 = vmatprep.mubr.f32.mxu0 0.0
    %435 = vmatmul.mubr.f32.gmra.mrb[0].mxu0 %v347
    %v436 = vpop.f32.mrb[0].mxu0
    %v437 = vadd.f32 %v340, %v436
    %v438 = vpop.f32.mrb[0].mxu0
    %439 = vmatprep.mubr.f32.mxu0 0.0
    %440 = vmatmul.mubr.f32.gmra.mrb[0].mxu0 %v350
    %v441 = vpop.f32.mrb[0].mxu0
    %v442 = vadd.f32 %v340, %v441
    %v443 = vpop.f32.mrb[0].mxu0
    %444 = vmatprep.mubr.f32.mxu0 0.0
    %445 = vmatmul.mubr.f32.gmra.mrb[0].mxu0 %v353
    %v446 = vpop.f32.mrb[0].mxu0
    %v447 = vadd.f32 %v340, %v446
    %v448 = vpop.f32.mrb[0].mxu0
    %449 = vmatprep.mubr.f32.mxu0 0.0
    %450 = vmatmul.mubr.f32.gmra.mrb[0].mxu0 %v356
    %v451 = vpop.f32.mrb[0].mxu0
    %v452 = vadd.f32 %v340, %v451
    %v453 = vpop.f32.mrb[0].mxu0
    %454 = vmatprep.mubr.f32.mxu0 0.0
    %455 = vmatmul.mubr.f32.gmra.mrb[0].mxu0 %v359
    %v456 = vpop.f32.mrb[0].mxu0
    %v457 = vadd.f32 %v340, %v456
    %v458 = vpop.f32.mrb[0].mxu0
    %459 = vdwg.mxu0
    %v460 = vxor.u32 %v432, 2147483648
    %v461 = vxor.u32 %v437, 2147483648
    %v462 = vxor.u32 %v442, 2147483648
    %v463 = vxor.u32 %v447, 2147483648
    %v464 = vxor.u32 %v452, 2147483648
    %v465 = vxor.u32 %v457, 2147483648
    %v466 = vmul.f32 %v460, 1.442695
    %v467 = vpow.pop %v466
    %v468 = vmul.f32 %v461, 1.442695
    %v469 = vpow.pop %v468
    %v470 = vmul.f32 %v462, 1.442695
    %v471 = vpow.pop %v470
    %v472 = vmul.f32 %v463, 1.442695
    %v473 = vpow.pop %v472
    %v474 = vmul.f32 %v464, 1.442695
    %v475 = vpow.pop %v474
    %v476 = vmul.f32 %v465, 1.442695
    %v477 = vpow.pop %v476
    %v478 = vadd.f32 %v467, 1.0
    %v479 = vadd.f32 %v469, 1.0
    %v480 = vadd.f32 %v471, 1.0
    %v481 = vadd.f32 %v473, 1.0
    %v482 = vadd.f32 %v475, 1.0
    %v483 = vadd.f32 %v477, 1.0
    %v484 = vrcp.pop %v478
    %v485 = vmul.f32 1.0, %v484
    %v486 = vrcp.pop %v479
    %v487 = vmul.f32 1.0, %v486
    %v488 = vrcp.pop %v480
    %v489 = vmul.f32 1.0, %v488
    %v490 = vrcp.pop %v481
    %v491 = vmul.f32 1.0, %v490
    %v492 = vrcp.pop %v482
    %v493 = vmul.f32 1.0, %v492
    %v494 = vrcp.pop %v483
    %v495 = vmul.f32 1.0, %v494
    %v496 = vld [vmem:[%s5] sm:$0xff]
    %v497 = vld [vmem:[%s5 + $0x8] sm:$0x3]
    %v498 = vld [vmem:[%s6] sm:$0x1]
    %v500 = vlaneseq
    %v501 = vshrl.u32 %v500, 7
    %v502 = vsub.s32 0, %v501
    %v503 = vrot.slane %v498, %v502
    %vm505 = vcmask 80896
    %v507 = vsel %vm505, %v485, 0
    %v510 = vsel %vm505, %v487, 0
    %v513 = vsel %vm505, %v489, 0
    %v516 = vsel %vm505, %v491, 0
    %v519 = vsel %vm505, %v493, 0
    %v522 = vsel %vm505, %v495, 0
    %vm524 = vcmask 1041408
    %v526 = vsel %vm524, %v497, 0
    %528 = vmatprep.subr.mxu0 0.0
    %529 = vmatpush1.msra.mxu0 %v496
    %530 = vmatprep.subr.mxu0 0.0
    %531 = vmatpush1.msra.mxu0 %v526
    %532 = vmatprep.subr.mxu0 0.0
    %533 = vmatpush1.msra.mxu0 0.0
    %534 = vmatprep.subr.mxu0 0.0
    %535 = vmatpush1.msra.mxu0 0.0
    %536 = vmatprep.subr.mxu0 0.0
    %537 = vmatpush1.msra.mxu0 0.0
    %538 = vmatprep.subr.mxu0 0.0
    %539 = vmatpush1.msra.mxu0 0.0
    %540 = vmatprep.subr.mxu0 0.0
    %541 = vmatpush1.msra.mxu0 0.0
    %542 = vmatprep.subr.mxu0 0.0
    %543 = vmatpush1.msra.mxu0 0.0
    %544 = vmatprep.subr.mxu0 0.0
    %545 = vmatpush1.msra.mxu0 0.0
    %546 = vmatprep.subr.mxu0 0.0
    %547 = vmatpush1.msra.mxu0 0.0
    %548 = vmatprep.subr.mxu0 0.0
    %549 = vmatpush1.msra.mxu0 0.0
    %550 = vmatprep.subr.mxu0 0.0
    %551 = vmatpush1.msra.mxu0 0.0
    %552 = vmatprep.subr.mxu0 0.0
    %553 = vmatpush1.msra.mxu0 0.0
    %554 = vmatprep.subr.mxu0 0.0
    %555 = vmatpush1.msra.mxu0 0.0
    %556 = vmatprep.subr.mxu0 0.0
    %557 = vmatpush1.msra.mxu0 0.0
    %558 = vmatprep.subr.mxu0 0.0
    %559 = vmatpush1.msra.mxu0 0.0
    %560 = vmatprep.subr.mxu0 0.0
    %561 = vmatpush1.msra.mxu0 0.0
    %562 = vmatprep.subr.mxu0 0.0
    %563 = vmatpush1.msra.mxu0 0.0
    %564 = vmatprep.subr.mxu0 0.0
    %565 = vmatpush1.msra.mxu0 0.0
    %566 = vmatprep.subr.mxu0 0.0
    %567 = vmatpush1.msra.mxu0 0.0
    %568 = vmatprep.subr.mxu0 0.0
    %569 = vmatpush1.msra.mxu0 0.0
    %570 = vmatprep.subr.mxu0 0.0
    %571 = vmatpush1.msra.mxu0 0.0
    %572 = vmatprep.subr.mxu0 0.0
    %573 = vmatpush1.msra.mxu0 0.0
    %574 = vmatprep.subr.mxu0 0.0
    %575 = vmatpush1.msra.mxu0 0.0
    %576 = vmatprep.subr.mxu0 0.0
    %577 = vmatpush1.msra.mxu0 0.0
    %578 = vmatprep.subr.mxu0 0.0
    %579 = vmatpush1.msra.mxu0 0.0
    %580 = vmatprep.subr.mxu0 0.0
    %581 = vmatpush1.msra.mxu0 0.0
    %582 = vmatprep.subr.mxu0 0.0
    %583 = vmatpush1.msra.mxu0 0.0
    %584 = vmatprep.subr.mxu0 0.0
    %585 = vmatpush1.msra.mxu0 0.0
    %586 = vmatprep.subr.mxu0 0.0
    %587 = vmatpush1.msra.mxu0 0.0
    %588 = vmatprep.subr.mxu0 0.0
    %589 = vmatpush1.msra.mxu0 0.0
    %590 = vmatprep.subr.mxu0 0.0
    %591 = vmatpush1.msra.mxu0 0.0
    %592 = vmatprep.mubr.f32.mxu0 0.0
    %593 = vmatmul.mubr.f32.gmra.mrb[0].mxu0 %v507
    %v594 = vpop.f32.mrb[0].mxu0
    %v595 = vadd.f32 %v503, %v594
    %v596 = vpop.f32.mrb[0].mxu0
    %597 = vmatprep.mubr.f32.mxu0 0.0
    %598 = vmatmul.mubr.f32.gmra.mrb[0].mxu0 %v510
    %v599 = vpop.f32.mrb[0].mxu0
    %v600 = vadd.f32 %v503, %v599
    %v601 = vpop.f32.mrb[0].mxu0
    %602 = vmatprep.mubr.f32.mxu0 0.0
    %603 = vmatmul.mubr.f32.gmra.mrb[0].mxu0 %v513
    %v604 = vpop.f32.mrb[0].mxu0
    %v605 = vadd.f32 %v503, %v604
    %v606 = vpop.f32.mrb[0].mxu0
    %607 = vmatprep.mubr.f32.mxu0 0.0
    %608 = vmatmul.mubr.f32.gmra.mrb[0].mxu0 %v516
    %v609 = vpop.f32.mrb[0].mxu0
    %v610 = vadd.f32 %v503, %v609
    %v611 = vpop.f32.mrb[0].mxu0
    %612 = vmatprep.mubr.f32.mxu0 0.0
    %613 = vmatmul.mubr.f32.gmra.mrb[0].mxu0 %v519
    %v614 = vpop.f32.mrb[0].mxu0
    %v615 = vadd.f32 %v503, %v614
    %v616 = vpop.f32.mrb[0].mxu0
    %617 = vmatprep.mubr.f32.mxu0 0.0
    %618 = vmatmul.mubr.f32.gmra.mrb[0].mxu0 %v522
    %v619 = vpop.f32.mrb[0].mxu0
    %v620 = vadd.f32 %v503, %v619
    %v621 = vpop.f32.mrb[0].mxu0
    %622 = vdwg.mxu0
    %v623 = vxor.u32 %v595, 2147483648
    %v624 = vxor.u32 %v600, 2147483648
    %v625 = vxor.u32 %v605, 2147483648
    %v626 = vxor.u32 %v610, 2147483648
    %v627 = vxor.u32 %v615, 2147483648
    %v628 = vxor.u32 %v620, 2147483648
    %v629 = vmul.f32 %v623, 1.442695
    %v630 = vpow.pop %v629
    %v631 = vmul.f32 %v624, 1.442695
    %v632 = vpow.pop %v631
    %v633 = vmul.f32 %v625, 1.442695
    %v634 = vpow.pop %v633
    %v635 = vmul.f32 %v626, 1.442695
    %v636 = vpow.pop %v635
    %v637 = vmul.f32 %v627, 1.442695
    %v638 = vpow.pop %v637
    %v639 = vmul.f32 %v628, 1.442695
    %v640 = vpow.pop %v639
    %v641 = vadd.f32 %v630, 1.0
    %v642 = vadd.f32 %v632, 1.0
    %v643 = vadd.f32 %v634, 1.0
    %v644 = vadd.f32 %v636, 1.0
    %v645 = vadd.f32 %v638, 1.0
    %v646 = vadd.f32 %v640, 1.0
    %v647 = vrcp.pop %v641
    %v648 = vmul.f32 1.0, %v647
    %v649 = vrcp.pop %v642
    %v650 = vmul.f32 1.0, %v649
    %v651 = vrcp.pop %v643
    %v652 = vmul.f32 1.0, %v651
    %v653 = vrcp.pop %v644
    %v654 = vmul.f32 1.0, %v653
    %v655 = vrcp.pop %v645
    %v656 = vmul.f32 1.0, %v655
    %v657 = vrcp.pop %v646
    %v658 = vmul.f32 1.0, %v657
    %v659 = vld [vmem:[%s7] sm:$0xff]
    %v660 = vld [vmem:[%s7 + $0x8] sm:$0xff]
    %v661 = vld [vmem:[%s7 + $0x10] sm:$0xff]
    %v662 = vld [vmem:[%s7 + $0x18] sm:$0xff]
    %v663 = vld [vmem:[%s7 + $0x20] sm:$0xff]
    %v664 = vld [vmem:[%s7 + $0x28] sm:$0xff]
    %v665 = vld [vmem:[%s7 + $0x30] sm:$0xf]
    %v666 = vld [vmem:[%s7 + $0x38] sm:$0xf]
    %v667 = vld [vmem:[%s7 + $0x40] sm:$0xf]
    %v668 = vld [vmem:[%s8] sm:$0x7]
    %v670 = vlaneseq
    %v671 = vshrl.u32 %v670, 7
    %v672 = vsub.s32 0, %v671
    %v673 = vrot.slane %v668, %v672
    %v674 = vlaneseq
    %v675 = vshrl.u32 %v674, 7
    %v676 = vsub.s32 1, %v675
    %v677 = vrot.slane %v668, %v676
    %v678 = vlaneseq
    %v679 = vshrl.u32 %v678, 7
    %v680 = vsub.s32 2, %v679
    %v681 = vrot.slane %v668, %v680
    %v686 = vsel %vm342, %v648, 0
    %v689 = vsel %vm342, %v650, 0
    %v692 = vsel %vm342, %v652, 0
    %v695 = vsel %vm342, %v654, 0
    %v698 = vsel %vm342, %v656, 0
    %v701 = vsel %vm342, %v658, 0
    %v704 = vsel %vm361, %v665, 0
    %v707 = vsel %vm361, %v666, 0
    %v710 = vsel %vm361, %v667, 0
    %712 = vmatprep.subr.mxu0 %v660
    %713 = vmatpush1.msra.mxu0 %v659
    %714 = vmatprep.subr.mxu0 %v663
    %715 = vmatpush1.msra.mxu0 %v662
    %716 = vmatprep.subr.mxu0 %v707
    %717 = vmatpush1.msra.mxu0 %v704
    %718 = vmatprep.subr.mxu0 0.0
    %719 = vmatpush1.msra.mxu0 0.0
    %720 = vmatprep.subr.mxu0 0.0
    %721 = vmatpush1.msra.mxu0 0.0
    %722 = vmatprep.subr.mxu0 0.0
    %723 = vmatpush1.msra.mxu0 0.0
    %724 = vmatprep.subr.mxu0 0.0
    %725 = vmatpush1.msra.mxu0 0.0
    %726 = vmatprep.subr.mxu0 0.0
    %727 = vmatpush1.msra.mxu0 0.0
    %728 = vmatprep.subr.mxu0 0.0
    %729 = vmatpush1.msra.mxu0 0.0
    %730 = vmatprep.subr.mxu0 0.0
    %731 = vmatpush1.msra.mxu0 0.0
    %732 = vmatprep.subr.mxu0 0.0
    %733 = vmatpush1.msra.mxu0 0.0
    %734 = vmatprep.subr.mxu0 0.0
    %735 = vmatpush1.msra.mxu0 0.0
    %736 = vmatprep.subr.mxu0 0.0
    %737 = vmatpush1.msra.mxu0 0.0
    %738 = vmatprep.subr.mxu0 0.0
    %739 = vmatpush1.msra.mxu0 0.0
    %740 = vmatprep.subr.mxu0 0.0
    %741 = vmatpush1.msra.mxu0 0.0
    %742 = vmatprep.subr.mxu0 0.0
    %743 = vmatpush1.msra.mxu0 0.0
    %744 = vmatprep.subr.mxu0 0.0
    %745 = vmatpush1.msra.mxu0 0.0
    %746 = vmatprep.subr.mxu0 0.0
    %747 = vmatpush1.msra.mxu0 0.0
    %748 = vmatprep.subr.mxu0 0.0
    %749 = vmatpush1.msra.mxu0 0.0
    %750 = vmatprep.subr.mxu0 0.0
    %751 = vmatpush1.msra.mxu0 0.0
    %752 = vmatprep.subr.mxu0 0.0
    %753 = vmatpush1.msra.mxu0 0.0
    %754 = vmatprep.subr.mxu0 0.0
    %755 = vmatpush1.msra.mxu0 0.0
    %756 = vmatprep.subr.mxu0 0.0
    %757 = vmatpush1.msra.mxu0 0.0
    %758 = vmatprep.subr.mxu0 0.0
    %759 = vmatpush1.msra.mxu0 0.0
    %760 = vmatprep.subr.mxu0 0.0
    %761 = vmatpush1.msra.mxu0 0.0
    %762 = vmatprep.subr.mxu0 0.0
    %763 = vmatpush1.msra.mxu0 0.0
    %764 = vmatprep.subr.mxu0 0.0
    %765 = vmatpush1.msra.mxu0 0.0
    %766 = vmatprep.subr.mxu0 0.0
    %767 = vmatpush1.msra.mxu0 0.0
    %768 = vmatprep.subr.mxu0 0.0
    %769 = vmatpush1.msra.mxu0 0.0
    %770 = vmatprep.subr.mxu0 0.0
    %771 = vmatpush1.msra.mxu0 0.0
    %772 = vmatprep.subr.mxu0 0.0
    %773 = vmatpush1.msra.mxu0 0.0
    %774 = vmatprep.subr.mxu0 0.0
    %775 = vmatpush1.msra.mxu0 0.0
    %776 = vmatprep.mubr.f32.mxu0 0.0
    %777 = vmatmul.mubr.f32.gmra.mrb[0].mxu0 %v686
    %v778 = vpop.f32.mrb[0].mxu0
    %v779 = vadd.f32 %v673, %v778
    %v780 = vpop.f32.mrb[0].mxu0
    %v781 = vadd.f32 %v677, %v780
    %782 = vmatprep.mubr.f32.mxu0 0.0
    %783 = vmatmul.mubr.f32.gmra.mrb[0].mxu0 %v689
    %v784 = vpop.f32.mrb[0].mxu0
    %v785 = vadd.f32 %v673, %v784
    %v786 = vpop.f32.mrb[0].mxu0
    %v787 = vadd.f32 %v677, %v786
    %788 = vmatprep.mubr.f32.mxu0 0.0
    %789 = vmatmul.mubr.f32.gmra.mrb[0].mxu0 %v692
    %v790 = vpop.f32.mrb[0].mxu0
    %v791 = vadd.f32 %v673, %v790
    %v792 = vpop.f32.mrb[0].mxu0
    %v793 = vadd.f32 %v677, %v792
    %794 = vmatprep.mubr.f32.mxu0 0.0
    %795 = vmatmul.mubr.f32.gmra.mrb[0].mxu0 %v695
    %v796 = vpop.f32.mrb[0].mxu0
    %v797 = vadd.f32 %v673, %v796
    %v798 = vpop.f32.mrb[0].mxu0
    %v799 = vadd.f32 %v677, %v798
    %800 = vmatprep.mubr.f32.mxu0 0.0
    %801 = vmatmul.mubr.f32.gmra.mrb[0].mxu0 %v698
    %v802 = vpop.f32.mrb[0].mxu0
    %v803 = vadd.f32 %v673, %v802
    %v804 = vpop.f32.mrb[0].mxu0
    %v805 = vadd.f32 %v677, %v804
    %806 = vmatprep.mubr.f32.mxu0 0.0
    %807 = vmatmul.mubr.f32.gmra.mrb[0].mxu0 %v701
    %v808 = vpop.f32.mrb[0].mxu0
    %v809 = vadd.f32 %v673, %v808
    %v810 = vpop.f32.mrb[0].mxu0
    %v811 = vadd.f32 %v677, %v810
    %812 = vdwg.mxu0
    %813 = vmatprep.subr.mxu0 0.0
    %814 = vmatpush1.msra.mxu0 %v661
    %815 = vmatprep.subr.mxu0 0.0
    %816 = vmatpush1.msra.mxu0 %v664
    %817 = vmatprep.subr.mxu0 0.0
    %818 = vmatpush1.msra.mxu0 %v710
    %819 = vmatprep.subr.mxu0 0.0
    %820 = vmatpush1.msra.mxu0 0.0
    %821 = vmatprep.subr.mxu0 0.0
    %822 = vmatpush1.msra.mxu0 0.0
    %823 = vmatprep.subr.mxu0 0.0
    %824 = vmatpush1.msra.mxu0 0.0
    %825 = vmatprep.subr.mxu0 0.0
    %826 = vmatpush1.msra.mxu0 0.0
    %827 = vmatprep.subr.mxu0 0.0
    %828 = vmatpush1.msra.mxu0 0.0
    %829 = vmatprep.subr.mxu0 0.0
    %830 = vmatpush1.msra.mxu0 0.0
    %831 = vmatprep.subr.mxu0 0.0
    %832 = vmatpush1.msra.mxu0 0.0
    %833 = vmatprep.subr.mxu0 0.0
    %834 = vmatpush1.msra.mxu0 0.0
    %835 = vmatprep.subr.mxu0 0.0
    %836 = vmatpush1.msra.mxu0 0.0
    %837 = vmatprep.subr.mxu0 0.0
    %838 = vmatpush1.msra.mxu0 0.0
    %839 = vmatprep.subr.mxu0 0.0
    %840 = vmatpush1.msra.mxu0 0.0
    %841 = vmatprep.subr.mxu0 0.0
    %842 = vmatpush1.msra.mxu0 0.0
    %843 = vmatprep.subr.mxu0 0.0
    %844 = vmatpush1.msra.mxu0 0.0
    %845 = vmatprep.subr.mxu0 0.0
    %846 = vmatpush1.msra.mxu0 0.0
    %847 = vmatprep.subr.mxu0 0.0
    %848 = vmatpush1.msra.mxu0 0.0
    %849 = vmatprep.subr.mxu0 0.0
    %850 = vmatpush1.msra.mxu0 0.0
    %851 = vmatprep.subr.mxu0 0.0
    %852 = vmatpush1.msra.mxu0 0.0
    %853 = vmatprep.subr.mxu0 0.0
    %854 = vmatpush1.msra.mxu0 0.0
    %855 = vmatprep.subr.mxu0 0.0
    %856 = vmatpush1.msra.mxu0 0.0
    %857 = vmatprep.subr.mxu0 0.0
    %858 = vmatpush1.msra.mxu0 0.0
    %859 = vmatprep.subr.mxu0 0.0
    %860 = vmatpush1.msra.mxu0 0.0
    %861 = vmatprep.subr.mxu0 0.0
    %862 = vmatpush1.msra.mxu0 0.0
    %863 = vmatprep.subr.mxu0 0.0
    %864 = vmatpush1.msra.mxu0 0.0
    %865 = vmatprep.subr.mxu0 0.0
    %866 = vmatpush1.msra.mxu0 0.0
    %867 = vmatprep.subr.mxu0 0.0
    %868 = vmatpush1.msra.mxu0 0.0
    %869 = vmatprep.subr.mxu0 0.0
    %870 = vmatpush1.msra.mxu0 0.0
    %871 = vmatprep.subr.mxu0 0.0
    %872 = vmatpush1.msra.mxu0 0.0
    %873 = vmatprep.subr.mxu0 0.0
    %874 = vmatpush1.msra.mxu0 0.0
    %875 = vmatprep.subr.mxu0 0.0
    %876 = vmatpush1.msra.mxu0 0.0
    %877 = vmatprep.mubr.f32.mxu0 0.0
    %878 = vmatmul.mubr.f32.gmra.mrb[0].mxu0 %v686
    %v879 = vpop.f32.mrb[0].mxu0
    %v880 = vadd.f32 %v681, %v879
    %v881 = vpop.f32.mrb[0].mxu0
    %882 = vmatprep.mubr.f32.mxu0 0.0
    %883 = vmatmul.mubr.f32.gmra.mrb[0].mxu0 %v689
    %v884 = vpop.f32.mrb[0].mxu0
    %v885 = vadd.f32 %v681, %v884
    %v886 = vpop.f32.mrb[0].mxu0
    %887 = vmatprep.mubr.f32.mxu0 0.0
    %888 = vmatmul.mubr.f32.gmra.mrb[0].mxu0 %v692
    %v889 = vpop.f32.mrb[0].mxu0
    %v890 = vadd.f32 %v681, %v889
    %v891 = vpop.f32.mrb[0].mxu0
    %892 = vmatprep.mubr.f32.mxu0 0.0
    %893 = vmatmul.mubr.f32.gmra.mrb[0].mxu0 %v695
    %v894 = vpop.f32.mrb[0].mxu0
    %v895 = vadd.f32 %v681, %v894
    %v896 = vpop.f32.mrb[0].mxu0
    %897 = vmatprep.mubr.f32.mxu0 0.0
    %898 = vmatmul.mubr.f32.gmra.mrb[0].mxu0 %v698
    %v899 = vpop.f32.mrb[0].mxu0
    %v900 = vadd.f32 %v681, %v899
    %v901 = vpop.f32.mrb[0].mxu0
    %902 = vmatprep.mubr.f32.mxu0 0.0
    %903 = vmatmul.mubr.f32.gmra.mrb[0].mxu0 %v701
    %v904 = vpop.f32.mrb[0].mxu0
    %v905 = vadd.f32 %v681, %v904
    %v906 = vpop.f32.mrb[0].mxu0
    %907 = vdwg.mxu0
    %908 = vst [vmem:[#allocation2] sm:$0xff] %v779
    %909 = vst [vmem:[#allocation2 + $0x8] sm:$0xff] %v781
    %910 = vst [vmem:[#allocation2 + $0x10] sm:$0xff] %v880
    %911 = vst [vmem:[#allocation2 + $0x18] sm:$0xff] %v785
    %912 = vst [vmem:[#allocation2 + $0x20] sm:$0xff] %v787
    %913 = vst [vmem:[#allocation2 + $0x28] sm:$0xff] %v885
    %914 = vst [vmem:[#allocation2 + $0x30] sm:$0xff] %v791
    %915 = vst [vmem:[#allocation2 + $0x38] sm:$0xff] %v793
    %916 = vst [vmem:[#allocation2 + $0x40] sm:$0xff] %v890
    %917 = vst [vmem:[#allocation2 + $0x48] sm:$0xff] %v797
    %918 = vst [vmem:[#allocation2 + $0x50] sm:$0xff] %v799
    %919 = vst [vmem:[#allocation2 + $0x58] sm:$0xff] %v895
    %920 = vst [vmem:[#allocation2 + $0x60] sm:$0xff] %v803
    %921 = vst [vmem:[#allocation2 + $0x68] sm:$0xff] %v805
    %922 = vst [vmem:[#allocation2 + $0x70] sm:$0xff] %v900
    %923 = vst [vmem:[#allocation2 + $0x78] sm:$0xff] %v809
    %924 = vst [vmem:[#allocation2 + $0x80] sm:$0xff] %v811
    %925 = vst [vmem:[#allocation2 + $0x88] sm:$0xff] %v905
    // Predicated region
    $region38: #{tpu_custom_call.1} parent=1 // pred_check
      _
    $region39: #{tpu_custom_call.1} parent=1 // pred_check_branch
      %927 = sbr.rel (0) target = $region41
    $region40: #{tpu_custom_call.1} parent=1 // pred_region
      %s929 = ssub.s32 2304, 2304
      %930 = vsyncadd [#allocation3], %s929
      %s931 = sshll.u32 [#allocation2], 4
      %s932 = int_to_ptr.vmem [resolvable:$true] %s931
      %937 = dma.vmem_to_hbm [thread:$0]  %s932, 2304, %s9, [#allocation3], 384, 384, 24
    $region41: #{tpu_custom_call.1} parent=1 // pred_fallthru
      _
    // Predicated region
    $region42: #{tpu_custom_call.1} parent=1 // pred_check
      _
    $region43: #{tpu_custom_call.1} parent=1 // pred_check_branch
      %939 = sbr.rel (0) target = $region45
    $region44: #{tpu_custom_call.1} parent=1 // pred_region
      %940 = dma.done [#allocation3], 2304
    $region45: #{tpu_custom_call.1} parent=1 // pred_fallthru
      _
    %941 = vsyncpa [#allocation3], 1

</llo_original>
